<compile_context>
chip_gen: v7x
topology: tpu7x:2x2x1
jax: 0.10.0
libtpu: 0.0.40
codegen_flags: <defaults>
</compile_context>

<pallas_src>
import jax
import jax.numpy as jnp
from jax.experimental import pallas as pl
from jax.experimental.pallas import tpu as pltpu

EPS = 1e-5


def _convt_in_relu_kernel(x_ref, w_ref, o_ref):
    # x_ref: (1, 4*Cin, H*W)  bf16   (taps [x, x>>col, x>>row, x>>both] stacked)
    # w_ref: (4*tc, 4*Cin)    bf16   (rows = (phase, channel) within the tile)
    # o_ref: (1, 4*tc, H*W)   f32    (phase-packed, lane-dense)
    hw = x_ref.shape[-1]
    c4 = o_ref.shape[1]
    c = c4 // 4

    # Transposed conv (all 4 output phases of this channel tile) as one MXU
    # matmul; f32 accumulation, H*W on the lane axis.
    acc = jnp.dot(w_ref[...], x_ref[0], preferred_element_type=jnp.float32)

    # InstanceNorm2d stats per channel: over all H*W positions of all 4
    # phases (= every pixel of the (2H, 2W) output exactly once).
    s = jnp.sum(acc, axis=1, keepdims=True)          # (4*tc, 1)
    q = jnp.sum(acc * acc, axis=1, keepdims=True)    # (4*tc, 1)
    s_c = s[0:c] + s[c:2 * c] + s[2 * c:3 * c] + s[3 * c:4 * c]   # (tc, 1)
    q_c = q[0:c] + q[c:2 * c] + q[2 * c:3 * c] + q[3 * c:4 * c]
    inv_n = 1.0 / (4.0 * hw)
    mean = s_c * inv_n
    var = jnp.maximum(q_c * inv_n - mean * mean, 0.0)   # clamp cancellation
    inv = jax.lax.rsqrt(var + EPS)                      # EUP slot

    mean4 = jnp.concatenate([mean, mean, mean, mean], axis=0)   # (4*tc, 1)
    inv4 = jnp.concatenate([inv, inv, inv, inv], axis=0)

    # normalize + ReLU; full-lane (H*W) store.
    o_ref[0] = jnp.maximum((acc - mean4) * inv4, 0.0).astype(o_ref.dtype)


def _pick_channel_tile(cout):
    """Channel-tile size: whole Cout when small, else a divisor that keeps
    4*tile a multiple of 8 and gives the pipeline more grid steps."""
    if cout <= 64:
        return cout
    for d in range(64, 7, -1):
        if cout % d == 0 and d % 8 == 0:
            return d
    return cout


def model_up_forward(x_nchw, w_t, bias=None):
    """x_nchw: (N, Cin, H, W); w_t: (Cin, Cout, 3, 3) (nn.ConvTranspose2d layout);
    bias: (Cout,) -- accepted for API parity but mathematically cancels under
    InstanceNorm(affine=False), so it is never materialized on-device.
    Returns (N, Cout, 2H, 2W) float32 (NCHW)."""
    N, Cin, H, W = x_nchw.shape
    Cout = w_t.shape[1]
    HW = H * W
    tc = _pick_channel_tile(Cout)
    n_ct = Cout // tc

    # ---- 4-tap slab, built directly in NCHW and in bf16 (no f32 copy) ----
    xb = x_nchw.astype(jnp.bfloat16)                              # (N,Cin,H,W)
    zc = jnp.zeros((N, Cin, H, 1), jnp.bfloat16)
    zr = jnp.zeros((N, Cin, 1, W), jnp.bfloat16)
    x_r = jnp.concatenate([xb[:, :, :, 1:], zc], axis=3)          # x[i, j+1]
    x_d = jnp.concatenate([xb[:, :, 1:, :], zr], axis=2)          # x[i+1, j]
    x_rd = jnp.concatenate([x_d[:, :, :, 1:], zc], axis=3)        # x[i+1, j+1]
    x4 = jnp.concatenate([xb, x_r, x_d, x_rd], axis=1)            # (N,4Cin,H,W)
    x4 = x4.reshape(N, 4 * Cin, HW)                               # lane dim = H*W

    # ---- phase-packed weights: rows = (ctile, phase, channel), cols = (tap, Cin)
    wf = w_t.astype(jnp.float32)
    Wk = lambda kh, kw: wf[:, :, kh, kw]                          # (Cin, Cout)
    Z = jnp.zeros((Cin, Cout), jnp.float32)
    T = jnp.stack([
        jnp.stack([Wk(1, 1), Wk(1, 2), Wk(2, 1), Wk(2, 2)], axis=1),  # tap x
        jnp.stack([Z,        Wk(1, 0), Z,        Wk(2, 0)], axis=1),  # tap x_r
        jnp.stack([Z,        Z,        Wk(0, 1), Wk(0, 2)], axis=1),  # tap x_d
        jnp.stack([Z,        Z,        Z,        Wk(0, 0)], axis=1),  # tap x_rd
    ], axis=0)                                          # (4_tap, Cin, 4_ph, Cout)
    Tp = jnp.transpose(T, (2, 3, 0, 1))                 # (4_ph, Cout, 4_tap, Cin)
    Tp = Tp.reshape(4, n_ct, tc, 4 * Cin)               # split Cout, merge taps
    w_all = jnp.transpose(Tp, (1, 0, 2, 3)).reshape(4 * Cout, 4 * Cin)
    w_all = w_all.astype(jnp.bfloat16)

    # ---- VMEM sizing (real need, double-buffered) instead of a blanket limit
    x_blk = 4 * Cin * HW * 2
    w_blk = 4 * tc * 4 * Cin * 2
    o_blk = 4 * tc * HW * 4
    need = 2 * (x_blk + w_blk + o_blk) + (1 << 20)
    vmem_limit = None if need <= (16 << 20) else min(need, 56 << 20)

    cp_kwargs = dict(dimension_semantics=("parallel", "parallel"))
    if vmem_limit is not None:
        cp_kwargs["vmem_limit_bytes"] = int(vmem_limit)

    y = pl.pallas_call(
        _convt_in_relu_kernel,
        out_shape=jax.ShapeDtypeStruct((N, 4 * Cout, HW), jnp.float32),
        grid_spec=pltpu.PrefetchScalarGridSpec(
            num_scalar_prefetch=0,
            grid=(N, n_ct),
            in_specs=[
                pl.BlockSpec((1, 4 * Cin, HW), lambda n, c: (n, 0, 0)),
                pl.BlockSpec((4 * tc, 4 * Cin), lambda n, c: (c, 0)),
            ],
            out_specs=pl.BlockSpec((1, 4 * tc, HW), lambda n, c: (n, c, 0)),
        ),
        compiler_params=pltpu.CompilerParams(**cp_kwargs),
    )(x4, w_all)

    # ---- single wrapper transpose: pixel-shuffle phases back to NCHW ----
    # rows = (ctile, phase=2a+b, channel-in-tile); lanes = (i, j)
    y = y.reshape(N, n_ct, 2, 2, tc, H, W)              # (n, ct, a, b, cl, i, j)
    y = jnp.transpose(y, (0, 1, 4, 5, 2, 6, 3))         # (n, ct, cl, i, a, j, b)
    return y.reshape(N, Cout, 2 * H, 2 * W)


def _reference(x_nchw, w_t, bias):
    """Pure-JAX reference: zero-inserted transposed conv + bias + InstanceNorm + ReLU."""
    N, Cin, H, W = x_nchw.shape
    Cout = w_t.shape[1]
    Hp, Wp = 2 * H + 2, 2 * W + 2
    xp = jnp.zeros((N, Cin, Hp, Wp), jnp.float32)
    xp = xp.at[:, :, 1:2 * H:2, 1:2 * W:2].set(x_nchw)
    wflip = w_t[:, :, ::-1, ::-1]
    y = jnp.zeros((N, Cout, 2 * H, 2 * W), jnp.float32)
    for kh in range(3):
        for kw in range(3):
            patch = xp[:, :, kh:kh + 2 * H, kw:kw + 2 * W]
            y = y + jnp.einsum('nihw,io->nohw', patch, wflip[:, :, kh, kw])
    y = y + bias.reshape(1, Cout, 1, 1)
    mean = y.mean(axis=(2, 3), keepdims=True)
    var = jnp.mean((y - mean) ** 2, axis=(2, 3), keepdims=True)
    y = (y - mean) * jax.lax.rsqrt(var + EPS)
    return jnp.maximum(y, 0.0)


if __name__ == "__main__":
    N, Cin, Cout, H, W = 2, 4, 8, 16, 16

    key = jax.random.PRNGKey(0)
    kx, kw, kb = jax.random.split(key, 3)

    x = jax.random.normal(kx, (N, Cin, H, W), jnp.float32)
    fan = Cout * 3 * 3
    bound = 1.0 / (fan ** 0.5)
    w = jax.random.uniform(kw, (Cin, Cout, 3, 3), jnp.float32, -bound, bound)
    b = jax.random.uniform(kb, (Cout,), jnp.float32, -bound, bound)

    out = model_up_forward(x, w, b)
    jax.block_until_ready(out)

    assert out.shape == (N, Cout, 2 * H, 2 * W), out.shape
    assert bool(jnp.all(out >= 0.0))                     # ReLU post-condition

    ref = _reference(x, w, b)
    max_err = float(jnp.max(jnp.abs(out - ref)))
    assert max_err < 5e-2, f"max_err={max_err}"          # bf16-matmul tolerance

    print("KERNEL_OK")
</pallas_src>

<mosaic_0001>
module attributes {stable_mosaic.version = 11 : i64} {
  func.func @_convt_in_relu_kernel(%arg0: i32, %arg1: i32, %arg2: memref<1x16x256xbf16, #tpu.memory_space<vmem>>, %arg3: memref<32x16xbf16, #tpu.memory_space<vmem>>, %arg4: memref<1x32x256xf32, #tpu.memory_space<vmem>>) attributes {dimension_semantics = [#tpu.dimension_semantics<parallel>, #tpu.dimension_semantics<parallel>], iteration_bounds = array<i64: 2, 1>, scalar_prefetch = 0 : i64, scratch_operands = 0 : i64, tpu.core_type = #tpu.core_type<tc>, window_params = [{transform_indices = @transform_0, window_bounds = array<i64: 1, 16, 256>}, {transform_indices = @transform_1, window_bounds = array<i64: 32, 16>}, {transform_indices = @transform_2, window_bounds = array<i64: 1, 32, 256>}]} {
    %c0 = arith.constant 0 : index
    %c0_0 = arith.constant 0 : index
    %0 = vector.load %arg3[%c0, %c0_0] : memref<32x16xbf16, #tpu.memory_space<vmem>>, vector<32x16xbf16>
    %c0_1 = arith.constant 0 : index
    %c0_2 = arith.constant 0 : index
    %c0_3 = arith.constant 0 : index
    %1 = vector.load %arg2[%c0_1, %c0_2, %c0_3] : memref<1x16x256xbf16, #tpu.memory_space<vmem>>, vector<1x16x256xbf16>
    %2 = vector.shape_cast %1 : vector<1x16x256xbf16> to vector<16x256xbf16>
    %cst = arith.constant dense<0.000000e+00> : vector<32x256xf32>
    %3 = tpu.matmul %0, %2, %cst {dimension_numbers = #tpu.dot_dimension_numbers<[1], [0], [0], [1], [0, 0, 1, 1], [], []>} : vector<32x16xbf16>, vector<16x256xbf16>, vector<32x256xf32> -> vector<32x256xf32>
    %cst_4 = arith.constant dense<0.000000e+00> : vector<32xf32>
    %4 = vector.multi_reduction <add>, %3, %cst_4 [1] : vector<32x256xf32> to vector<32xf32>
    %5 = vector.shape_cast %4 : vector<32xf32> to vector<32x1xf32>
    %6 = arith.mulf %3, %3 : vector<32x256xf32>
    %cst_5 = arith.constant dense<0.000000e+00> : vector<32xf32>
    %7 = vector.multi_reduction <add>, %6, %cst_5 [1] : vector<32x256xf32> to vector<32xf32>
    %8 = vector.shape_cast %7 : vector<32xf32> to vector<32x1xf32>
    %9 = vector.extract_strided_slice %5 {offsets = [0, 0], sizes = [8, 1], strides = [1, 1]} : vector<32x1xf32> to vector<8x1xf32>
    %10 = vector.extract_strided_slice %5 {offsets = [8, 0], sizes = [8, 1], strides = [1, 1]} : vector<32x1xf32> to vector<8x1xf32>
    %11 = arith.addf %9, %10 : vector<8x1xf32>
    %12 = vector.extract_strided_slice %5 {offsets = [16, 0], sizes = [8, 1], strides = [1, 1]} : vector<32x1xf32> to vector<8x1xf32>
    %13 = arith.addf %11, %12 : vector<8x1xf32>
    %14 = vector.extract_strided_slice %5 {offsets = [24, 0], sizes = [8, 1], strides = [1, 1]} : vector<32x1xf32> to vector<8x1xf32>
    %15 = arith.addf %13, %14 : vector<8x1xf32>
    %16 = vector.extract_strided_slice %8 {offsets = [0, 0], sizes = [8, 1], strides = [1, 1]} : vector<32x1xf32> to vector<8x1xf32>
    %17 = vector.extract_strided_slice %8 {offsets = [8, 0], sizes = [8, 1], strides = [1, 1]} : vector<32x1xf32> to vector<8x1xf32>
    %18 = arith.addf %16, %17 : vector<8x1xf32>
    %19 = vector.extract_strided_slice %8 {offsets = [16, 0], sizes = [8, 1], strides = [1, 1]} : vector<32x1xf32> to vector<8x1xf32>
    %20 = arith.addf %18, %19 : vector<8x1xf32>
    %21 = vector.extract_strided_slice %8 {offsets = [24, 0], sizes = [8, 1], strides = [1, 1]} : vector<32x1xf32> to vector<8x1xf32>
    %22 = arith.addf %20, %21 : vector<8x1xf32>
    %cst_6 = arith.constant 9.765625E-4 : f32
    %23 = vector.broadcast %cst_6 : f32 to vector<8x1xf32>
    %24 = arith.mulf %15, %23 : vector<8x1xf32>
    %cst_7 = arith.constant 9.765625E-4 : f32
    %25 = vector.broadcast %cst_7 : f32 to vector<8x1xf32>
    %26 = arith.mulf %22, %25 : vector<8x1xf32>
    %27 = arith.mulf %24, %24 : vector<8x1xf32>
    %28 = arith.subf %26, %27 : vector<8x1xf32>
    %cst_8 = arith.constant 0.000000e+00 : f32
    %29 = vector.broadcast %cst_8 : f32 to vector<8x1xf32>
    %30 = arith.maximumf %28, %29 : vector<8x1xf32>
    %cst_9 = arith.constant 9.99999974E-6 : f32
    %31 = vector.broadcast %cst_9 : f32 to vector<8x1xf32>
    %32 = arith.addf %30, %31 : vector<8x1xf32>
    %33 = math.rsqrt %32 : vector<8x1xf32>
    %34 = tpu.concatenate %24, %24, %24, %24 in 0 : vector<8x1xf32>, vector<8x1xf32>, vector<8x1xf32>, vector<8x1xf32> -> vector<32x1xf32>
    %35 = tpu.concatenate %33, %33, %33, %33 in 0 : vector<8x1xf32>, vector<8x1xf32>, vector<8x1xf32>, vector<8x1xf32> -> vector<32x1xf32>
    %36 = vector.broadcast %34 : vector<32x1xf32> to vector<32x256xf32>
    %37 = arith.subf %3, %36 : vector<32x256xf32>
    %38 = vector.broadcast %35 : vector<32x1xf32> to vector<32x256xf32>
    %39 = arith.mulf %37, %38 : vector<32x256xf32>
    %cst_10 = arith.constant 0.000000e+00 : f32
    %40 = vector.broadcast %cst_10 : f32 to vector<32x256xf32>
    %41 = arith.maximumf %39, %40 : vector<32x256xf32>
    %c0_11 = arith.constant 0 : index
    %c0_12 = arith.constant 0 : index
    %c0_13 = arith.constant 0 : index
    %42 = vector.load %arg4[%c0_11, %c0_12, %c0_13] : memref<1x32x256xf32, #tpu.memory_space<vmem>>, vector<1x32x256xf32>
    %43 = vector.shape_cast %42 : vector<1x32x256xf32> to vector<32x256xf32>
    %44 = vector.shape_cast %41 : vector<32x256xf32> to vector<1x32x256xf32>
    tpu.vector_store %arg4[%c0_11, %c0_12, %c0_13], %44 {strides = array<i32>} : memref<1x32x256xf32, #tpu.memory_space<vmem>>, vector<1x32x256xf32>,
    return
  }
  func.func @transform_0(%arg0: i32, %arg1: i32) -> (i32, i32, i32) {
    %c0_i32 = arith.constant 0 : i32
    %c0_i32_0 = arith.constant 0 : i32
    %c0_i32_1 = arith.constant 0 : i32
    return %arg0, %c0_i32, %c0_i32_0 : i32, i32, i32
  }
  func.func @transform_1(%arg0: i32, %arg1: i32) -> (i32, i32) {
    %c0_i32 = arith.constant 0 : i32
    %c0_i32_0 = arith.constant 0 : i32
    return %arg1, %c0_i32 : i32, i32
  }
  func.func @transform_2(%arg0: i32, %arg1: i32) -> (i32, i32, i32) {
    %c0_i32 = arith.constant 0 : i32
    %c0_i32_0 = arith.constant 0 : i32
    return %arg0, %arg1, %c0_i32 : i32, i32, i32
  }
}

</mosaic_0001>

<llo_original>
// kernel: tpu_custom_call.1
$region0: #{tpu_custom_call.1}
  #allocation0 [shape = 'u32[]', space=smem, size = 0x4, offset = 0x4, fixed_abs, tag = 'smem constant byte address 0x4 - core index']
  #allocation1 [shape = 'u32[144,128]{1,0:T(1,128)}', space=vmem, size = 0x12000, scoped, tag = 'internal scratch']
  %s0 = inlined_call_operand.hbm [shape: bf16[2,16,256], index: 0, kind: input, shape index: {}]
  %s1 = inlined_call_operand.vmem [shape: bf16[32,16], index: 1, kind: input, shape index: {}]
  %s2 = inlined_call_operand.hbm [shape: f32[2,32,256], index: 2, kind: output, shape index: {}]
  %s3 = sld [smem:[#allocation0]]
  $region45: #{tpu_custom_call.1} parent=0
    _
  %s5 = ssub.s32 1, %s3
  %s6 = scalar_select 0, %s5, %s3
  $region1: #{tpu_custom_call.1} parent=0
    #allocation2 [shape = 'u8[16384]{0}', space=vmem, size = 0x4000, scoped, tag = 'input window, operand 0']
    #allocation3 [shape = 's32[2]{0}', space=sflag, size = 0x8, scoped, tag = 'scoped memory for tpu_custom_call.1']
    #allocation4 [shape = 's32[2]{0}', space=sflag, size = 0x8, scoped, tag = 'scoped memory for tpu_custom_call.1']
    #allocation5 [shape = 'u8[65536]{0}', space=vmem, size = 0x10000, scoped, tag = 'output window, operand 0']
    %7 = vsyncpa [#allocation3], 0
    %s8 = scalar_lea.sflag [#allocation3], 1
    %9 = vsyncpa %s8, 0
    %10 = vsyncpa [#allocation4], 0
    %s11 = scalar_lea.sflag [#allocation4], 1
    %12 = vsyncpa %s11, 0
    loop: start=0, step=1, limit=4
    $region2: #{tpu_custom_call.1} parent=1 // loop_pre_header
      _
    $region3: #{tpu_custom_call.1} parent=1 // loop_header
      %s14 = sphi 0, %s18
      %p15 = scmp.ge.s32.totalorder %s14, 4
      %s21 = sphi 0, %s33
      %s22 = sphi 0, %s29
      %s23 = sphi 0, %s21
      %s24 = sphi 0, %s22
      %s25 = sphi 0, %s23
      %s26 = sphi 0, %s24
      %s36 = sphi 0, %s38
      %s39 = sphi 0, %s36
      %s40 = sphi 0, %s39
      %s56 = sphi 0, %s40
      %s62 = sphi 0, %s64
      %s65 = sphi 0, %s62
      %s66 = sphi 0, %s65
      %s82 = sphi 0, %s66
      %s90 = sphi 0, %s92
      %s93 = sphi 0, %s90
      %s94 = sphi 0, %s93
      %s110 = sphi 0, %s94
    $region4: #{tpu_custom_call.1} parent=1 // loop_header_branch
      %17 = sbr.rel (%p15) target = $region8
    $region5: #{tpu_custom_call.1} parent=1 // loop_body
      %s19 = ssub.s32 %s14, 1
      %s20 = ssub.s32 %s14, 2
      %s27 = sadd.s32 1, %s22
      %p28 = scmp.ge.s32.totalorder %s27, 1
      %s29 = scalar_select %p28, 0, %s27
      %s30 = sadd.s32 1, %s21
      %s31 = scalar_select %p28, %s30, %s21
      %p32 = scmp.ge.s32.totalorder %s31, 2
      %s33 = scalar_select %p32, 0, %s31
      %s34 = ssub.s32 %s21, %s33
      %p35 = scmp.eq.s32.totalorder %s34, 0
      %s37 = sadd.s32 %s36, 1
      %s38 = scalar_select %p35, %s36, %s37
      %p41 = pneg %p35
      %p42 = scmp.eq.s32.totalorder %s14, 1
      %p43 = por %p41, %p42
      %p44 = scmp.ne.s32.totalorder %s36, %s39
      %p45 = scmp.eq.s32.totalorder %s14, 0
      %p46 = por %p44, %p45
      %p47 = scmp.ne.s32.totalorder %s36, %s39
      %p48 = scmp.eq.s32.totalorder %s19, 1
      %p49 = por %p47, %p48
      %p50 = scmp.ne.s32.totalorder %s39, %s40
      %p51 = scmp.eq.s32.totalorder %s19, 0
      %p52 = por %p50, %p51
      %p53 = scmp.ne.s32.totalorder %s39, %s40
      %p54 = scmp.eq.s32.totalorder %s20, 1
      %p55 = por %p53, %p54
      %p57 = scmp.ne.s32.totalorder %s40, %s56
      %p58 = scmp.eq.s32.totalorder %s20, 0
      %p59 = por %p57, %p58
      %s60 = ssub.s32 %s22, %s29
      %p61 = scmp.eq.s32.totalorder %s60, 0
      %s63 = sadd.s32 %s62, 1
      %s64 = scalar_select %p61, %s62, %s63
      %p67 = pneg %p61
      %p68 = scmp.eq.s32.totalorder %s14, 1
      %p69 = por %p67, %p68
      %p70 = scmp.ne.s32.totalorder %s62, %s65
      %p71 = scmp.eq.s32.totalorder %s14, 0
      %p72 = por %p70, %p71
      %p73 = scmp.ne.s32.totalorder %s62, %s65
      %p74 = scmp.eq.s32.totalorder %s19, 1
      %p75 = por %p73, %p74
      %p76 = scmp.ne.s32.totalorder %s65, %s66
      %p77 = scmp.eq.s32.totalorder %s19, 0
      %p78 = por %p76, %p77
      %p79 = scmp.ne.s32.totalorder %s65, %s66
      %p80 = scmp.eq.s32.totalorder %s20, 1
      %p81 = por %p79, %p80
      %p83 = scmp.ne.s32.totalorder %s66, %s82
      %p84 = scmp.eq.s32.totalorder %s20, 0
      %p85 = por %p83, %p84
      %s86 = ssub.s32 %s21, %s33
      %s87 = ssub.s32 %s22, %s29
      %s88 = sor.u32 %s86, %s87
      %p89 = scmp.eq.s32.totalorder %s88, 0
      %s91 = sadd.s32 %s90, 1
      %s92 = scalar_select %p89, %s90, %s91
      %p95 = pneg %p89
      %p96 = scmp.eq.s32.totalorder %s14, 1
      %p97 = por %p95, %p96
      %p98 = scmp.ne.s32.totalorder %s90, %s93
      %p99 = scmp.eq.s32.totalorder %s14, 0
      %p100 = por %p98, %p99
      %p101 = scmp.ne.s32.totalorder %s90, %s93
      %p102 = scmp.eq.s32.totalorder %s19, 1
      %p103 = por %p101, %p102
      %p104 = scmp.ne.s32.totalorder %s93, %s94
      %p105 = scmp.eq.s32.totalorder %s19, 0
      %p106 = por %p104, %p105
      %p107 = scmp.ne.s32.totalorder %s93, %s94
      %p108 = scmp.eq.s32.totalorder %s20, 1
      %p109 = por %p107, %p108
      %p111 = scmp.ne.s32.totalorder %s94, %s110
      %p112 = scmp.eq.s32.totalorder %s20, 0
      %p113 = por %p111, %p112
      %p114 = scmp.le.s32.totalorder 1, %s14
      %p115 = scmp.lt.s32.totalorder %s14, 3
      %p116 = pnand %p114, %p115
      %p117 = pneg %p116
      // Predicated region
      $region9: #{tpu_custom_call.1} parent=5 // pred_check
        _
      $region10: #{tpu_custom_call.1} parent=5 // pred_check_branch
        %119 = sbr.rel (%p116) target = $region12
      $region11: #{tpu_custom_call.1} parent=5 // pred_region
        %s120 = ssub.s32 %s14, 1
        // Predicated region
        $region13: #{tpu_custom_call.1} parent=11 // pred_check
          %p121 = pneg %p78
        $region14: #{tpu_custom_call.1} parent=11 // pred_check_branch
          %123 = sbr.rel (%p121) target = $region16
        $region15: #{tpu_custom_call.1} parent=11 // pred_region
          %s124 = smul.u32 4, %s24
          %p125 = scmp.lt.s32.totalorder %s124, 3
          %s126 = scalar_select %p125, %s124, 3
          %s127 = smul.addr %s126, 4
          %s128 = scalar_lea.vmem %s1, %s127
          %s129 = smul.u32 4, %s24
        $region16: #{tpu_custom_call.1} parent=11 // pred_fallthru
          _
      $region12: #{tpu_custom_call.1} parent=5 // pred_fallthru
        _
      %p130 = scmp.lt.s32.totalorder %s14, 2
      // Predicated region
      $region17: #{tpu_custom_call.1} parent=5 // pred_check
        %p131 = pneg %p130
      $region18: #{tpu_custom_call.1} parent=5 // pred_check_branch
        %133 = sbr.rel (%p131) target = $region20
      $region19: #{tpu_custom_call.1} parent=5 // pred_region
        // Predicated region
        $region21: #{tpu_custom_call.1} parent=19 // pred_check
          %p134 = pneg %p46
        $region22: #{tpu_custom_call.1} parent=19 // pred_check_branch
          %136 = sbr.rel (%p134) target = $region24
        $region23: #{tpu_custom_call.1} parent=19 // pred_region
          %s137 = sand.u32 %s36, 1
          %s138 = scalar_lea.sflag [#allocation3], %s137
          %s139 = sand.u32 %s36, 1
          %s140 = smul.addr %s139, 16
          %s141 = scalar_lea.vmem [#allocation2], %s140
          %s143 = ssub.s32 256, 256
          %144 = vsyncadd %s138, %s143
          %s145 = smul.addr %s21, 4
          %s146 = smul.addr %s145, 64
          %s147 = scalar_lea.hbm %s0, %s146
          %s148 = sshll.u32 %s141, 4
          %s149 = int_to_ptr.vmem [resolvable:$true] %s148
          %154 = dma.hbm_to_vmem [thread:$0]  %s147, 256, %s149, %s138, 128, 128, 8
        $region24: #{tpu_custom_call.1} parent=19 // pred_fallthru
          _
      $region20: #{tpu_custom_call.1} parent=5 // pred_fallthru
        _
      %p155 = scmp.le.s32.totalorder 1, %s14
      %p156 = scmp.lt.s32.totalorder %s14, 3
      %p157 = pnand %p155, %p156
      %p158 = pneg %p157
      // Predicated region
      $region25: #{tpu_custom_call.1} parent=5 // pred_check
        _
      $region26: #{tpu_custom_call.1} parent=5 // pred_check_branch
        %160 = sbr.rel (%p157) target = $region28
      $region27: #{tpu_custom_call.1} parent=5 // pred_region
        %s161 = ssub.s32 %s14, 1
        %s162 = sand.u32 %s39, 1
        %s163 = scalar_lea.sflag [#allocation3], %s162
        %s164 = sand.u32 %s39, 1
        %s165 = smul.addr %s164, 16
        %s166 = scalar_lea.vmem [#allocation2], %s165
        // Predicated region
        $region29: #{tpu_custom_call.1} parent=27 // pred_check
          %p167 = pneg %p52
        $region30: #{tpu_custom_call.1} parent=27 // pred_check_branch
          %169 = sbr.rel (%p167) target = $region32
        $region31: #{tpu_custom_call.1} parent=27 // pred_region
          %170 = dma.done %s163, 256
        $region32: #{tpu_custom_call.1} parent=27 // pred_fallthru
          _
        %s171 = sand.u32 %s39, 1
        %s172 = scalar_lea.sflag [#allocation3], %s171
        %s173 = sand.u32 %s39, 1
        %s174 = smul.addr %s173, 16
        %s175 = scalar_lea.vmem [#allocation2], %s174
        %p176 = pneg %p52
        %p177 = pneg %p49
        %s178 = smul.u32 4, %s24
        %p179 = scmp.lt.s32.totalorder %s178, 3
        %s180 = scalar_select %p179, %s178, 3
        %s181 = smul.addr %s180, 4
        %s182 = scalar_lea.vmem %s1, %s181
        %p183 = pneg %p78
        %p184 = pneg %p75
        %p185 = pneg %p106
        %p186 = pneg %p103
        %s187 = sand.u32 %s93, 1
        %s188 = scalar_lea.sflag [#allocation4], %s187
        %s189 = sand.u32 %s93, 1
        %s190 = smul.addr %s189, 64
        %s191 = scalar_lea.vmem [#allocation5], %s190
        %s192 = smul.u32 4, %s24
        %p193 = scmp.lt.s32.totalorder %s192, 3
        %s194 = scalar_select %p193, %s192, 3
        %s195 = smul.addr %s194, 4
        %s196 = scalar_lea.vmem %s1, %s195
        %s197 = smul.u32 4, %s24
        %s198 = smul.u32 4, %s24
        %v200 = vld [vmem:[%s196] sm:$0xf]
        %v201 = vld [vmem:[%s196 + $0x4] sm:$0xf]
        %v202 = vld [vmem:[%s196 + $0x8] sm:$0xf]
        %v203 = vld [vmem:[%s196 + $0xc] sm:$0xf]
        %v204 = vld [vmem:[%s166] sm:$0xff]
        %v205 = vld [vmem:[%s166 + $0x8] sm:$0xff]
        %v210 = vunpack.c.l.b16 %v200
        %v211 = vunpack.c.l.b16 %v201
        %v212 = vunpack.c.l.b16 %v202
        %v213 = vunpack.c.l.b16 %v203
        %v214 = vpack.c.b16 %v211, %v210
        %v215 = vpack.c.b16 %v213, %v212
        %v218 = vunpack.c.l.b16 %v204
        %v219 = vunpack.c.h.b16 %v204
        %v220 = vunpack.c.l.b16 %v205
        %v221 = vunpack.c.h.b16 %v205
        %v222 = vpack.c.b16 %v220, %v218
        %v223 = vpack.c.b16 %v221, %v219
        %vm226 = vcmask 130048
        %v228 = vsel %vm226, %v214, 0
        %v231 = vsel %vm226, %v215, 0
        %233 = vmatprep.subr.bf16.mxu0 %v223
        %234 = vmatpush1.bf16.msra.mxu0 %v222
        %235 = vmatprep.subr.bf16.mxu0 0
        %236 = vmatpush1.bf16.msra.mxu0 0
        %237 = vmatprep.subr.bf16.mxu0 0
        %238 = vmatpush1.bf16.msra.mxu0 0
        %239 = vmatprep.subr.bf16.mxu0 0
        %240 = vmatpush1.bf16.msra.mxu0 0
        %241 = vmatprep.subr.bf16.mxu0 0
        %242 = vmatpush1.bf16.msra.mxu0 0
        %243 = vmatprep.subr.bf16.mxu0 0
        %244 = vmatpush1.bf16.msra.mxu0 0
        %245 = vmatprep.subr.bf16.mxu0 0
        %246 = vmatpush1.bf16.msra.mxu0 0
        %247 = vmatprep.subr.bf16.mxu0 0
        %248 = vmatpush1.bf16.msra.mxu0 0
        %249 = vmatprep.subr.bf16.mxu0 0
        %250 = vmatpush1.bf16.msra.mxu0 0
        %251 = vmatprep.subr.bf16.mxu0 0
        %252 = vmatpush1.bf16.msra.mxu0 0
        %253 = vmatprep.subr.bf16.mxu0 0
        %254 = vmatpush1.bf16.msra.mxu0 0
        %255 = vmatprep.subr.bf16.mxu0 0
        %256 = vmatpush1.bf16.msra.mxu0 0
        %257 = vmatprep.subr.bf16.mxu0 0
        %258 = vmatpush1.bf16.msra.mxu0 0
        %259 = vmatprep.subr.bf16.mxu0 0
        %260 = vmatpush1.bf16.msra.mxu0 0
        %261 = vmatprep.subr.bf16.mxu0 0
        %262 = vmatpush1.bf16.msra.mxu0 0
        %263 = vmatprep.subr.bf16.mxu0 0
        %264 = vmatpush1.bf16.msra.mxu0 0
        %265 = vmatprep.mubr.bf16.mxu0 0
        %266 = vmatmul.mubr.bf16.gmra.mrb[0].mxu0 %v228
        %v267 = vpop.f32.mrb[0].mxu0
        %v268 = vadd.f32 0.0, %v267
        %v269 = vpop.f32.mrb[0].mxu0
        %v270 = vadd.f32 0.0, %v269
        %v271 = vpop.f32.mrb[0].mxu0
        %v272 = vadd.f32 0.0, %v271
        %v273 = vpop.f32.mrb[0].mxu0
        %v274 = vadd.f32 0.0, %v273
        %275 = vmatprep.mubr.bf16.mxu0 0
        %276 = vmatmul.mubr.bf16.gmra.mrb[0].mxu0 %v231
        %v277 = vpop.f32.mrb[0].mxu0
        %v278 = vadd.f32 0.0, %v277
        %v279 = vpop.f32.mrb[0].mxu0
        %v280 = vadd.f32 0.0, %v279
        %v281 = vpop.f32.mrb[0].mxu0
        %v282 = vadd.f32 0.0, %v281
        %v283 = vpop.f32.mrb[0].mxu0
        %v284 = vadd.f32 0.0, %v283
        %285 = vdwg.mxu0
        %v286 = vadd.f32 %v268, %v270
        %287 = vadd.xlane.f32.xlu0 %v286
        %v288 = vpop.xlane.xlu0 %287
        %v289 = vadd.f32 %v272, %v274
        %290 = vadd.xlane.f32.xlu0 %v289
        %v291 = vpop.xlane.xlu0 %290
        %v292 = vadd.f32 %v278, %v280
        %293 = vadd.xlane.f32.xlu0 %v292
        %v294 = vpop.xlane.xlu0 %293
        %v295 = vadd.f32 %v282, %v284
        %296 = vadd.xlane.f32.xlu0 %v295
        %v297 = vpop.xlane.xlu0 %296
        %v298 = vmul.f32 %v268, %v268
        %v299 = vmul.f32 %v270, %v270
        %v300 = vmul.f32 %v272, %v272
        %v301 = vmul.f32 %v274, %v274
        %v302 = vmul.f32 %v278, %v278
        %v303 = vmul.f32 %v280, %v280
        %v304 = vmul.f32 %v282, %v282
        %v305 = vmul.f32 %v284, %v284
        %v306 = vadd.f32 %v298, %v299
        %307 = vadd.xlane.f32.xlu0 %v306
        %v308 = vpop.xlane.xlu0 %307
        %v309 = vadd.f32 %v300, %v301
        %310 = vadd.xlane.f32.xlu0 %v309
        %v311 = vpop.xlane.xlu0 %310
        %v312 = vadd.f32 %v302, %v303
        %313 = vadd.xlane.f32.xlu0 %v312
        %v314 = vpop.xlane.xlu0 %313
        %v315 = vadd.f32 %v304, %v305
        %316 = vadd.xlane.f32.xlu0 %v315
        %v317 = vpop.xlane.xlu0 %316
        %v318 = vadd.f32 %v288, %v291
        %v319 = vadd.f32 %v318, %v294
        %v320 = vadd.f32 %v319, %v297
        %v321 = vadd.f32 %v308, %v311
        %v322 = vadd.f32 %v321, %v314
        %v323 = vadd.f32 %v322, %v317
        %v324 = vmul.f32 %v320, 0.0009765625
        %v325 = vmul.f32 %v323, 0.0009765625
        %v326 = vmul.f32 %v324, %v324
        %v327 = vsub.f32 %v325, %v326
        %v328 = vmax.f32 %v327, 0.0
        %v329 = vadd.f32 %v328, 1e-05
        %v330 = vrsqrt.pop %v329
        %332 = vset.pattern.permute.xlu0 0
        %333 = vperm.xlu0 %332, %v324
        %v334 = vpop.permute.xlu0 %333
        %v336 = vsub.f32 %v268, %v334
        %v337 = vsub.f32 %v270, %v334
        %v338 = vsub.f32 %v272, %v334
        %v339 = vsub.f32 %v274, %v334
        %v340 = vsub.f32 %v278, %v334
        %v341 = vsub.f32 %v280, %v334
        %v342 = vsub.f32 %v282, %v334
        %v343 = vsub.f32 %v284, %v334
        %345 = vset.pattern.permute.xlu0 0
        %346 = vperm.xlu0 %345, %v330
        %v347 = vpop.permute.xlu0 %346
        %v349 = vmul.f32 %v336, %v347
        %v350 = vmul.f32 %v337, %v347
        %v351 = vmul.f32 %v338, %v347
        %v352 = vmul.f32 %v339, %v347
        %v353 = vmul.f32 %v340, %v347
        %v354 = vmul.f32 %v341, %v347
        %v355 = vmul.f32 %v342, %v347
        %v356 = vmul.f32 %v343, %v347
        %v357 = vmax.f32 %v349, 0.0
        %v358 = vmax.f32 %v350, 0.0
        %v359 = vmax.f32 %v351, 0.0
        %v360 = vmax.f32 %v352, 0.0
        %v361 = vmax.f32 %v353, 0.0
        %v362 = vmax.f32 %v354, 0.0
        %v363 = vmax.f32 %v355, 0.0
        %v364 = vmax.f32 %v356, 0.0
        %365 = vst [vmem:[%s191] sm:$0xff] %v357
        %366 = vst [vmem:[%s191 + $0x8] sm:$0xff] %v358
        %367 = vst [vmem:[%s191 + $0x10] sm:$0xff] %v359
        %368 = vst [vmem:[%s191 + $0x18] sm:$0xff] %v360
        %369 = vst [vmem:[%s191 + $0x20] sm:$0xff] %v361
        %370 = vst [vmem:[%s191 + $0x28] sm:$0xff] %v362
        %371 = vst [vmem:[%s191 + $0x30] sm:$0xff] %v363
        %372 = vst [vmem:[%s191 + $0x38] sm:$0xff] %v364
        %s373 = sand.u32 %s93, 1
        %s374 = scalar_lea.sflag [#allocation4], %s373
        %s375 = sand.u32 %s93, 1
        %s376 = smul.addr %s375, 64
        %s377 = scalar_lea.vmem [#allocation5], %s376
        // Predicated region
        $region33: #{tpu_custom_call.1} parent=27 // pred_check
          %p378 = pneg %p103
        $region34: #{tpu_custom_call.1} parent=27 // pred_check_branch
          %380 = sbr.rel (%p378) target = $region36
        $region35: #{tpu_custom_call.1} parent=27 // pred_region
          %s381 = smul.u32 4, %s24
          %s383 = ssub.s32 1024, 1024
          %384 = vsyncadd %s374, %s383
          %s385 = smul.addr %s381, 2
          %s386 = smul.addr %s23, 8
          %s387 = sadd.s32 %s385, %s386
          %s388 = smul.addr %s387, 128
          %s389 = scalar_lea.hbm %s2, %s388
          %s390 = sshll.u32 %s377, 4
          %s391 = int_to_ptr.vmem [resolvable:$true] %s390
          %396 = dma.vmem_to_hbm [thread:$0]  %s391, 1024, %s389, %s374, 256, 256, 16
        $region36: #{tpu_custom_call.1} parent=27 // pred_fallthru
          _
      $region28: #{tpu_custom_call.1} parent=5 // pred_fallthru
        _
      %p397 = scmp.le.s32.totalorder 2, %s14
      // Predicated region
      $region37: #{tpu_custom_call.1} parent=5 // pred_check
        %p398 = pneg %p397
      $region38: #{tpu_custom_call.1} parent=5 // pred_check_branch
        %400 = sbr.rel (%p398) target = $region40
      $region39: #{tpu_custom_call.1} parent=5 // pred_region
        %s401 = ssub.s32 %s14, 2
        // Predicated region
        $region41: #{tpu_custom_call.1} parent=39 // pred_check
          %p402 = pneg %p109
        $region42: #{tpu_custom_call.1} parent=39 // pred_check_branch
          %404 = sbr.rel (%p402) target = $region44
        $region43: #{tpu_custom_call.1} parent=39 // pred_region
          %s405 = sand.u32 %s94, 1
          %s406 = scalar_lea.sflag [#allocation4], %s405
          %s407 = sand.u32 %s94, 1
          %s408 = smul.addr %s407, 64
          %s409 = scalar_lea.vmem [#allocation5], %s408
          %410 = dma.done %s406, 1024
        $region44: #{tpu_custom_call.1} parent=39 // pred_fallthru
          _
      $region40: #{tpu_custom_call.1} parent=5 // pred_fallthru
        _
    $region6: #{tpu_custom_call.1} parent=1 // loop_footer
      %s18 = sadd.s32 1, %s14
    $region7: #{tpu_custom_call.1} parent=1 // loop_footer_branch
      %13 = sbr.rel target = $region3
    $region8: #{tpu_custom_call.1} parent=1 // loop_exit
      _
    %411 = vsyncpa [#allocation3], 1
    %s412 = scalar_lea.sflag [#allocation3], 1
    %413 = vsyncpa %s412, 1
    %414 = vsyncpa [#allocation4], 1
    %s415 = scalar_lea.sflag [#allocation4], 1
    %416 = vsyncpa %s415, 1

</llo_original>
